<compile_context>
chip_gen: v7x
topology: tpu7x:2x2x1
jax: 0.10.0
libtpu: 0.0.40
codegen_flags: <defaults>
</compile_context>

<pallas_src>
import functools

import jax
import jax.numpy as jnp
from jax.experimental import pallas as pl
from jax.experimental.pallas import tpu as pltpu

KH = KW = 3          # fixed 3x3 kernel, stride 1, padding 1
SUBLANE = 8          # f32 sublane multiple


def _mod(a, m):
    """Vector a mod m; uses a bitwise-and when m is a power of two (always the
    case for the 16x16 images here) so only trivially-supported VPU ops are used."""
    if m & (m - 1) == 0:
        return a & (m - 1)
    return a % m


def conv3x3_kernel(x_ref, w_ref, o_ref, col_ref, *, img_h, img_w, n_batch):
    # x_ref:   (Cin_pad, L)   L = N*H*W; lane index = n*H*W + h*W + w.
    #                         Row `Cin` is an all-ones bias channel, rest zero pad.
    # w_ref:   (Cout, KH*KW*Cin_pad)  per-tap weight columns; bias sits in the
    #                                 center tap's ones-channel column.
    # o_ref:   (N, Cout, H*W)
    # col_ref: (KH*KW*Cin_pad, L)  VMEM scratch holding the im2col tile.
    cin_pad, L = x_ref.shape
    p = img_h * img_w

    x = x_ref[...]

    # Per-lane image coordinates -> edge-validity masks (computed once, on VPU).
    lane = jax.lax.broadcasted_iota(jnp.int32, (cin_pad, L), 1)
    q = _mod(lane, p)            # flat position within its image
    c = _mod(lane, img_w)        # column within its image
    row_ok = {-1: q >= img_w, 0: None, 1: q < p - img_w}
    col_ok = {-1: c >= 1,      0: None, 1: c < img_w - 1}

    # Build the im2col tile: 9 lane-rolled, edge-masked copies of x.
    for t in range(KH * KW):
        kh, kw = divmod(t, KW)
        dh, dw = kh - 1, kw - 1
        src_off = dh * img_w + dw            # out[l] reads x[l + src_off]
        xs = x if src_off == 0 else pltpu.roll(x, shift=(-src_off) % L, axis=1)
        conds = [m for m in (row_ok[dh], col_ok[dw]) if m is not None]
        if conds:                             # center tap (all-valid) skips this
            cond = conds[0] if len(conds) == 1 else jnp.logical_and(*conds)
            xs = jnp.where(cond, xs, 0.0)     # zero padded-border / cross-image taps
        col_ref[pl.ds(t * cin_pad, cin_pad), :] = xs

    # Single MXU contraction: (Cout, 72) @ (72, L) -> (Cout, L); bias included.
    res = jnp.dot(w_ref[...], col_ref[...], preferred_element_type=jnp.float32)

    # Lane-dense (Cout, 256) stores back to (N, Cout, H*W); slice points are
    # multiples of 128 so no masked partial stores.
    for n in range(n_batch):
        o_ref[n] = res[:, n * p:(n + 1) * p].astype(o_ref.dtype)


def conv2d_3x3(x_nchw, weight_oihw, bias):
    """Equivalent of nn.Conv2d(Cin, Cout, 3, stride=1, padding=1)(x_nchw)."""
    n, cin, h, w = x_nchw.shape
    cout = weight_oihw.shape[0]
    p = h * w
    L = n * p
    # +1 for the bias channel, rounded up to the f32 sublane multiple (3+1 -> 8).
    cin_pad = ((cin + 1 + SUBLANE - 1) // SUBLANE) * SUBLANE

    # (N, Cin, H, W) -> (Cin_pad, N*H*W): batch fused into the lane axis, plus an
    # all-ones bias channel and zero channel padding (tiny one-time transpose).
    x_cl = jnp.transpose(x_nchw.reshape(n, cin, p), (1, 0, 2)).reshape(cin, L)
    x_flat = jnp.concatenate(
        [x_cl,
         jnp.ones((1, L), x_nchw.dtype),
         jnp.zeros((cin_pad - cin - 1, L), x_nchw.dtype)], axis=0)

    # (Cout, Cin, KH, KW) -> one lane-dense (Cout, KH*KW*Cin_pad) weight block.
    # Column t*Cin_pad + c holds weight[:, c, kh, kw]; the bias goes into the
    # center tap's ones-channel column.
    w_taps = jnp.transpose(weight_oihw, (2, 3, 1, 0)).reshape(KH * KW, cin, cout)
    w_taps = jnp.pad(w_taps, ((0, 0), (0, cin_pad - cin), (0, 0)))
    center = (KH // 2) * KW + (KW // 2)
    w_taps = w_taps.at[center, cin, :].set(bias)
    w_mat = w_taps.reshape(KH * KW * cin_pad, cout).T           # (Cout, 72)

    kernel = functools.partial(conv3x3_kernel, img_h=h, img_w=w, n_batch=n)
    out_flat = pl.pallas_call(
        kernel,
        out_shape=jax.ShapeDtypeStruct((n, cout, p), x_nchw.dtype),
        in_specs=[pl.BlockSpec(memory_space=pltpu.MemorySpace.VMEM),
                  pl.BlockSpec(memory_space=pltpu.MemorySpace.VMEM)],
        out_specs=pl.BlockSpec(memory_space=pltpu.MemorySpace.VMEM),
        scratch_shapes=[pltpu.VMEM((KH * KW * cin_pad, L), jnp.float32)],
    )(x_flat, w_mat)

    return out_flat.reshape(n, cout, h, w)        # free reshape back to NCHW


if __name__ == "__main__":
    key = jax.random.PRNGKey(0)
    k_x, k_w, k_b = jax.random.split(key, 3)

    N, Cin, H, W = 2, 3, 16, 16
    Cout = 8

    # Deterministic synthetic parameters (Conv2d(3, 8, 3, 1, 1) shapes).
    fan_in = Cin * KH * KW
    bound = 1.0 / (fan_in ** 0.5)
    x = jax.random.normal(k_x, (N, Cin, H, W), dtype=jnp.float32)
    weight = jax.random.uniform(k_w, (Cout, Cin, KH, KW), jnp.float32, -bound, bound)
    bias = jax.random.uniform(k_b, (Cout,), jnp.float32, -bound, bound)

    conv = jax.jit(conv2d_3x3)
    out = jax.block_until_ready(conv(x, weight, bias))

    # Reference check against XLA's conv (also validates the fused-batch masking).
    ref = jax.lax.conv_general_dilated(
        x, weight, window_strides=(1, 1), padding=((1, 1), (1, 1)),
        dimension_numbers=("NCHW", "OIHW", "NCHW"))
    ref = ref + bias[None, :, None, None]

    assert out.shape == (N, Cout, H, W), out.shape
    assert jnp.allclose(out, ref, atol=1e-4, rtol=1e-4), float(jnp.max(jnp.abs(out - ref)))

    print("KERNEL_OK")
</pallas_src>

<mosaic_0001>
module attributes {stable_mosaic.version = 11 : i64} {
  func.func @conv3x3_kernel(%arg0: memref<8x512xf32, #tpu.memory_space<vmem>>, %arg1: memref<8x72xf32, #tpu.memory_space<vmem>>, %arg2: memref<2x8x256xf32, #tpu.memory_space<vmem>>, %arg3: memref<72x512xf32, #tpu.memory_space<vmem>>) attributes {dimension_semantics = [], scalar_prefetch = 0 : i64, scratch_operands = 1 : i64, tpu.core_type = #tpu.core_type<tc>} {
    %c0 = arith.constant 0 : index
    %c0_0 = arith.constant 0 : index
    %0 = vector.load %arg0[%c0, %c0_0] : memref<8x512xf32, #tpu.memory_space<vmem>>, vector<8x512xf32>
    %1 = tpu.iota {dimensions = array<i32: 1>} : vector<8x512xi32>
    %c255_i32 = arith.constant 255 : i32
    %2 = vector.broadcast %c255_i32 : i32 to vector<8x512xi32>
    %3 = arith.andi %1, %2 : vector<8x512xi32>
    %c15_i32 = arith.constant 15 : i32
    %4 = vector.broadcast %c15_i32 : i32 to vector<8x512xi32>
    %5 = arith.andi %1, %4 : vector<8x512xi32>
    %c16_i32 = arith.constant 16 : i32
    %6 = vector.broadcast %c16_i32 : i32 to vector<8x512xi32>
    %7 = arith.cmpi sge, %3, %6 : vector<8x512xi32>
    %c240_i32 = arith.constant 240 : i32
    %8 = vector.broadcast %c240_i32 : i32 to vector<8x512xi32>
    %9 = arith.cmpi slt, %3, %8 : vector<8x512xi32>
    %c1_i32 = arith.constant 1 : i32
    %10 = vector.broadcast %c1_i32 : i32 to vector<8x512xi32>
    %11 = arith.cmpi sge, %5, %10 : vector<8x512xi32>
    %c15_i32_1 = arith.constant 15 : i32
    %12 = vector.broadcast %c15_i32_1 : i32 to vector<8x512xi32>
    %13 = arith.cmpi slt, %5, %12 : vector<8x512xi32>
    %c17_i32 = arith.constant 17 : i32
    %14 = tpu.dynamic_rotate %0 by %c17_i32 dim 1 : vector<8x512xf32>, i32 -> vector<8x512xf32>
    %15 = arith.andi %7, %11 : vector<8x512xi1>
    %cst = arith.constant 0.000000e+00 : f32
    %16 = vector.broadcast %cst : f32 to vector<8x512xf32>
    %17 = arith.select %15, %14, %16 : vector<8x512xi1>, vector<8x512xf32>
    %c0_2 = arith.constant 0 : index
    %c0_3 = arith.constant 0 : index
    %18 = vector.load %arg3[%c0_2, %c0_3] : memref<72x512xf32, #tpu.memory_space<vmem>>, vector<8x512xf32>
    tpu.vector_store %arg3[%c0_2, %c0_3], %17 {strides = array<i32>} : memref<72x512xf32, #tpu.memory_space<vmem>>, vector<8x512xf32>,
    %c16_i32_4 = arith.constant 16 : i32
    %19 = tpu.dynamic_rotate %0 by %c16_i32_4 dim 1 : vector<8x512xf32>, i32 -> vector<8x512xf32>
    %cst_5 = arith.constant 0.000000e+00 : f32
    %20 = vector.broadcast %cst_5 : f32 to vector<8x512xf32>
    %21 = arith.select %7, %19, %20 : vector<8x512xi1>, vector<8x512xf32>
    %c8 = arith.constant 8 : index
    %c0_6 = arith.constant 0 : index
    %22 = vector.load %arg3[%c8, %c0_6] : memref<72x512xf32, #tpu.memory_space<vmem>>, vector<8x512xf32>
    tpu.vector_store %arg3[%c8, %c0_6], %21 {strides = array<i32>} : memref<72x512xf32, #tpu.memory_space<vmem>>, vector<8x512xf32>,
    %c15_i32_7 = arith.constant 15 : i32
    %23 = tpu.dynamic_rotate %0 by %c15_i32_7 dim 1 : vector<8x512xf32>, i32 -> vector<8x512xf32>
    %24 = arith.andi %7, %13 : vector<8x512xi1>
    %cst_8 = arith.constant 0.000000e+00 : f32
    %25 = vector.broadcast %cst_8 : f32 to vector<8x512xf32>
    %26 = arith.select %24, %23, %25 : vector<8x512xi1>, vector<8x512xf32>
    %c16 = arith.constant 16 : index
    %c0_9 = arith.constant 0 : index
    %27 = vector.load %arg3[%c16, %c0_9] : memref<72x512xf32, #tpu.memory_space<vmem>>, vector<8x512xf32>
    tpu.vector_store %arg3[%c16, %c0_9], %26 {strides = array<i32>} : memref<72x512xf32, #tpu.memory_space<vmem>>, vector<8x512xf32>,
    %c1_i32_10 = arith.constant 1 : i32
    %28 = tpu.dynamic_rotate %0 by %c1_i32_10 dim 1 : vector<8x512xf32>, i32 -> vector<8x512xf32>
    %cst_11 = arith.constant 0.000000e+00 : f32
    %29 = vector.broadcast %cst_11 : f32 to vector<8x512xf32>
    %30 = arith.select %11, %28, %29 : vector<8x512xi1>, vector<8x512xf32>
    %c24 = arith.constant 24 : index
    %c0_12 = arith.constant 0 : index
    %31 = vector.load %arg3[%c24, %c0_12] : memref<72x512xf32, #tpu.memory_space<vmem>>, vector<8x512xf32>
    tpu.vector_store %arg3[%c24, %c0_12], %30 {strides = array<i32>} : memref<72x512xf32, #tpu.memory_space<vmem>>, vector<8x512xf32>,
    %c32 = arith.constant 32 : index
    %c0_13 = arith.constant 0 : index
    %32 = vector.load %arg3[%c32, %c0_13] : memref<72x512xf32, #tpu.memory_space<vmem>>, vector<8x512xf32>
    tpu.vector_store %arg3[%c32, %c0_13], %0 {strides = array<i32>} : memref<72x512xf32, #tpu.memory_space<vmem>>, vector<8x512xf32>,
    %c511_i32 = arith.constant 511 : i32
    %33 = tpu.dynamic_rotate %0 by %c511_i32 dim 1 : vector<8x512xf32>, i32 -> vector<8x512xf32>
    %cst_14 = arith.constant 0.000000e+00 : f32
    %34 = vector.broadcast %cst_14 : f32 to vector<8x512xf32>
    %35 = arith.select %13, %33, %34 : vector<8x512xi1>, vector<8x512xf32>
    %c40 = arith.constant 40 : index
    %c0_15 = arith.constant 0 : index
    %36 = vector.load %arg3[%c40, %c0_15] : memref<72x512xf32, #tpu.memory_space<vmem>>, vector<8x512xf32>
    tpu.vector_store %arg3[%c40, %c0_15], %35 {strides = array<i32>} : memref<72x512xf32, #tpu.memory_space<vmem>>, vector<8x512xf32>,
    %c497_i32 = arith.constant 497 : i32
    %37 = tpu.dynamic_rotate %0 by %c497_i32 dim 1 : vector<8x512xf32>, i32 -> vector<8x512xf32>
    %38 = arith.andi %9, %11 : vector<8x512xi1>
    %cst_16 = arith.constant 0.000000e+00 : f32
    %39 = vector.broadcast %cst_16 : f32 to vector<8x512xf32>
    %40 = arith.select %38, %37, %39 : vector<8x512xi1>, vector<8x512xf32>
    %c48 = arith.constant 48 : index
    %c0_17 = arith.constant 0 : index
    %41 = vector.load %arg3[%c48, %c0_17] : memref<72x512xf32, #tpu.memory_space<vmem>>, vector<8x512xf32>
    tpu.vector_store %arg3[%c48, %c0_17], %40 {strides = array<i32>} : memref<72x512xf32, #tpu.memory_space<vmem>>, vector<8x512xf32>,
    %c496_i32 = arith.constant 496 : i32
    %42 = tpu.dynamic_rotate %0 by %c496_i32 dim 1 : vector<8x512xf32>, i32 -> vector<8x512xf32>
    %cst_18 = arith.constant 0.000000e+00 : f32
    %43 = vector.broadcast %cst_18 : f32 to vector<8x512xf32>
    %44 = arith.select %9, %42, %43 : vector<8x512xi1>, vector<8x512xf32>
    %c56 = arith.constant 56 : index
    %c0_19 = arith.constant 0 : index
    %45 = vector.load %arg3[%c56, %c0_19] : memref<72x512xf32, #tpu.memory_space<vmem>>, vector<8x512xf32>
    tpu.vector_store %arg3[%c56, %c0_19], %44 {strides = array<i32>} : memref<72x512xf32, #tpu.memory_space<vmem>>, vector<8x512xf32>,
    %c495_i32 = arith.constant 495 : i32
    %46 = tpu.dynamic_rotate %0 by %c495_i32 dim 1 : vector<8x512xf32>, i32 -> vector<8x512xf32>
    %47 = arith.andi %9, %13 : vector<8x512xi1>
    %cst_20 = arith.constant 0.000000e+00 : f32
    %48 = vector.broadcast %cst_20 : f32 to vector<8x512xf32>
    %49 = arith.select %47, %46, %48 : vector<8x512xi1>, vector<8x512xf32>
    %c64 = arith.constant 64 : index
    %c0_21 = arith.constant 0 : index
    %50 = vector.load %arg3[%c64, %c0_21] : memref<72x512xf32, #tpu.memory_space<vmem>>, vector<8x512xf32>
    tpu.vector_store %arg3[%c64, %c0_21], %49 {strides = array<i32>} : memref<72x512xf32, #tpu.memory_space<vmem>>, vector<8x512xf32>,
    %c0_22 = arith.constant 0 : index
    %c0_23 = arith.constant 0 : index
    %51 = vector.load %arg1[%c0_22, %c0_23] : memref<8x72xf32, #tpu.memory_space<vmem>>, vector<8x72xf32>
    %c0_24 = arith.constant 0 : index
    %c0_25 = arith.constant 0 : index
    %52 = vector.load %arg3[%c0_24, %c0_25] : memref<72x512xf32, #tpu.memory_space<vmem>>, vector<72x512xf32>
    %cst_26 = arith.constant dense<0.000000e+00> : vector<8x512xf32>
    %53 = tpu.matmul %51, %52, %cst_26 {dimension_numbers = #tpu.dot_dimension_numbers<[1], [0], [0], [1], [0, 0, 1, 1], [], []>} : vector<8x72xf32>, vector<72x512xf32>, vector<8x512xf32> -> vector<8x512xf32>
    %54 = vector.extract_strided_slice %53 {offsets = [0, 0], sizes = [8, 256], strides = [1, 1]} : vector<8x512xf32> to vector<8x256xf32>
    %c0_27 = arith.constant 0 : index
    %c0_28 = arith.constant 0 : index
    %c0_29 = arith.constant 0 : index
    %55 = vector.load %arg2[%c0_27, %c0_28, %c0_29] : memref<2x8x256xf32, #tpu.memory_space<vmem>>, vector<1x8x256xf32>
    %56 = vector.shape_cast %55 : vector<1x8x256xf32> to vector<8x256xf32>
    %57 = vector.shape_cast %54 : vector<8x256xf32> to vector<1x8x256xf32>
    tpu.vector_store %arg2[%c0_27, %c0_28, %c0_29], %57 {strides = array<i32>} : memref<2x8x256xf32, #tpu.memory_space<vmem>>, vector<1x8x256xf32>,
    %58 = vector.extract_strided_slice %53 {offsets = [0, 256], sizes = [8, 256], strides = [1, 1]} : vector<8x512xf32> to vector<8x256xf32>
    %c1 = arith.constant 1 : index
    %c0_30 = arith.constant 0 : index
    %c0_31 = arith.constant 0 : index
    %59 = vector.load %arg2[%c1, %c0_30, %c0_31] : memref<2x8x256xf32, #tpu.memory_space<vmem>>, vector<1x8x256xf32>
    %60 = vector.shape_cast %59 : vector<1x8x256xf32> to vector<8x256xf32>
    %61 = vector.shape_cast %58 : vector<8x256xf32> to vector<1x8x256xf32>
    tpu.vector_store %arg2[%c1, %c0_30, %c0_31], %61 {strides = array<i32>} : memref<2x8x256xf32, #tpu.memory_space<vmem>>, vector<1x8x256xf32>,
    return
  }
}

</mosaic_0001>

<llo_original>
// kernel: conv2d_3x3.1
$region0: #{conv2d_3x3.1}
  #allocation0 [shape = 'u32[]', space=smem, size = 0x4, offset = 0x4, fixed_abs, tag = 'smem constant byte address 0x4 - core index']
  #allocation1 [shape = 'u32[144,128]{1,0:T(1,128)}', space=vmem, size = 0x12000, scoped, tag = 'internal scratch']
  #allocation2 [shape = 'f32[72,512]{1,0:T(8,128)}', space=vmem, size = 0x24000, scoped, tag = 'scratch operand']
  %s0 = inlined_call_operand.vmem [shape: f32[8,512], index: 0, kind: input, shape index: {}]
  %s1 = inlined_call_operand.vmem [shape: f32[8,72], index: 1, kind: input, shape index: {}]
  %s2 = inlined_call_operand.vmem [shape: f32[2,8,256], index: 2, kind: output, shape index: {}]
  %s3 = sld [smem:[#allocation0]]
  $region18: #{conv2d_3x3.1} parent=0
    _
  %s5 = ssub.s32 1, %s3
  %s6 = scalar_select 0, %s5, %s3
  // Predicated region
  $region2: #{conv2d_3x3.1} parent=0 // pred_check
    _
  $region3: #{conv2d_3x3.1} parent=0 // pred_check_branch
    %8 = sbr.rel (0) target = $region5
  $region4: #{conv2d_3x3.1} parent=0 // pred_region
    _
  $region5: #{conv2d_3x3.1} parent=0 // pred_fallthru
    _
  // Predicated region
  $region6: #{conv2d_3x3.1} parent=0 // pred_check
    _
  $region7: #{conv2d_3x3.1} parent=0 // pred_check_branch
    %10 = sbr.rel (0) target = $region9
  $region8: #{conv2d_3x3.1} parent=0 // pred_region
    _
  $region9: #{conv2d_3x3.1} parent=0 // pred_fallthru
    _
  %v11 = vld [vmem:[%s0] sm:$0xff]
  %v12 = vld [vmem:[%s0 + $0x8] sm:$0xff]
  %v13 = vld [vmem:[%s0 + $0x10] sm:$0xff]
  %v14 = vld [vmem:[%s0 + $0x18] sm:$0xff]
  %v15 = vlaneseq
  %v16 = vand.u32 %v15, 127
  %v17 = vadd.s32 %v16, 128
  %v18 = vadd.s32 %v16, 256
  %v19 = vadd.s32 %v16, 384
  %v20 = vand.u32 %v16, 255
  %v21 = vand.u32 %v17, 255
  %v22 = vand.u32 %v18, 255
  %v23 = vand.u32 %v19, 255
  %v24 = vand.u32 %v16, 15
  %v25 = vand.u32 %v17, 15
  %v26 = vand.u32 %v18, 15
  %v27 = vand.u32 %v19, 15
  %vm28 = vcmp.ge.s32.totalorder %v20, 16
  %vm29 = vcmp.ge.s32.totalorder %v21, 16
  %vm30 = vcmp.ge.s32.totalorder %v22, 16
  %vm31 = vcmp.ge.s32.totalorder %v23, 16
  %vm32 = vcmp.lt.s32.totalorder %v20, 240
  %vm33 = vcmp.lt.s32.totalorder %v21, 240
  %vm34 = vcmp.lt.s32.totalorder %v22, 240
  %vm35 = vcmp.lt.s32.totalorder %v23, 240
  %vm36 = vcmp.ge.s32.totalorder %v24, 1
  %vm37 = vcmp.ge.s32.totalorder %v25, 1
  %vm38 = vcmp.ge.s32.totalorder %v26, 1
  %vm39 = vcmp.ge.s32.totalorder %v27, 1
  %vm40 = vcmp.lt.s32.totalorder %v24, 15
  %vm41 = vcmp.lt.s32.totalorder %v25, 15
  %vm42 = vcmp.lt.s32.totalorder %v26, 15
  %vm43 = vcmp.lt.s32.totalorder %v27, 15
  %44 = vrot.lane.b32.xlu0 %v11, 17
  %v45 = vpop.permute.xlu0 %44
  %46 = vrot.lane.b32.xlu0 %v12, 17
  %v47 = vpop.permute.xlu0 %46
  %48 = vrot.lane.b32.xlu0 %v13, 17
  %v49 = vpop.permute.xlu0 %48
  %50 = vrot.lane.b32.xlu0 %v14, 17
  %v51 = vpop.permute.xlu0 %50
  %vm52 = vcmp.lt.s32.totalorder %v16, 17
  %v53 = vsel %vm52, %v49, %v51
  %v54 = vsel %vm52, %v47, %v49
  %v55 = vsel %vm52, %v45, %v47
  %v56 = vsel %vm52, %v51, %v45
  %vm57 = vmand %vm28, %vm36
  %vm58 = vmand %vm29, %vm37
  %vm59 = vmand %vm30, %vm38
  %vm60 = vmand %vm31, %vm39
  %v61 = vsel %vm57, %v56, 0.0
  %v62 = vsel %vm58, %v55, 0.0
  %v63 = vsel %vm59, %v54, 0.0
  %v64 = vsel %vm60, %v53, 0.0
  %65 = vst [vmem:[#allocation2] sm:$0xff] %v61
  %66 = vst [vmem:[#allocation2 + $0x8] sm:$0xff] %v62
  %67 = vst [vmem:[#allocation2 + $0x10] sm:$0xff] %v63
  %68 = vst [vmem:[#allocation2 + $0x18] sm:$0xff] %v64
  %69 = vrot.lane.b32.xlu0 %v11, 16
  %v70 = vpop.permute.xlu0 %69
  %71 = vrot.lane.b32.xlu0 %v12, 16
  %v72 = vpop.permute.xlu0 %71
  %73 = vrot.lane.b32.xlu0 %v13, 16
  %v74 = vpop.permute.xlu0 %73
  %75 = vrot.lane.b32.xlu0 %v14, 16
  %v76 = vpop.permute.xlu0 %75
  %vm77 = vcmp.lt.s32.totalorder %v16, 16
  %v78 = vsel %vm77, %v74, %v76
  %v79 = vsel %vm77, %v72, %v74
  %v80 = vsel %vm77, %v70, %v72
  %v81 = vsel %vm77, %v76, %v70
  %v82 = vsel %vm28, %v81, 0.0
  %v83 = vsel %vm29, %v80, 0.0
  %v84 = vsel %vm30, %v79, 0.0
  %v85 = vsel %vm31, %v78, 0.0
  %86 = vst [vmem:[#allocation2 + $0x20] sm:$0xff] %v82
  %87 = vst [vmem:[#allocation2 + $0x28] sm:$0xff] %v83
  %88 = vst [vmem:[#allocation2 + $0x30] sm:$0xff] %v84
  %89 = vst [vmem:[#allocation2 + $0x38] sm:$0xff] %v85
  %90 = vrot.lane.b32.xlu0 %v11, 15
  %v91 = vpop.permute.xlu0 %90
  %92 = vrot.lane.b32.xlu0 %v12, 15
  %v93 = vpop.permute.xlu0 %92
  %94 = vrot.lane.b32.xlu0 %v13, 15
  %v95 = vpop.permute.xlu0 %94
  %96 = vrot.lane.b32.xlu0 %v14, 15
  %v97 = vpop.permute.xlu0 %96
  %vm98 = vcmp.lt.s32.totalorder %v16, 15
  %v99 = vsel %vm98, %v95, %v97
  %v100 = vsel %vm98, %v93, %v95
  %v101 = vsel %vm98, %v91, %v93
  %v102 = vsel %vm98, %v97, %v91
  %vm103 = vmand %vm28, %vm40
  %vm104 = vmand %vm29, %vm41
  %vm105 = vmand %vm30, %vm42
  %vm106 = vmand %vm31, %vm43
  %v107 = vsel %vm103, %v102, 0.0
  %v108 = vsel %vm104, %v101, 0.0
  %v109 = vsel %vm105, %v100, 0.0
  %v110 = vsel %vm106, %v99, 0.0
  %111 = vst [vmem:[#allocation2 + $0x40] sm:$0xff] %v107
  %112 = vst [vmem:[#allocation2 + $0x48] sm:$0xff] %v108
  %113 = vst [vmem:[#allocation2 + $0x50] sm:$0xff] %v109
  %114 = vst [vmem:[#allocation2 + $0x58] sm:$0xff] %v110
  %115 = vrot.lane.b32.xlu0 %v11, 1
  %v116 = vpop.permute.xlu0 %115
  %117 = vrot.lane.b32.xlu0 %v12, 1
  %v118 = vpop.permute.xlu0 %117
  %119 = vrot.lane.b32.xlu0 %v13, 1
  %v120 = vpop.permute.xlu0 %119
  %121 = vrot.lane.b32.xlu0 %v14, 1
  %v122 = vpop.permute.xlu0 %121
  %vm123 = vcmp.lt.s32.totalorder %v16, 1
  %v124 = vsel %vm123, %v120, %v122
  %v125 = vsel %vm123, %v118, %v120
  %v126 = vsel %vm123, %v116, %v118
  %v127 = vsel %vm123, %v122, %v116
  %v128 = vsel %vm36, %v127, 0.0
  %v129 = vsel %vm37, %v126, 0.0
  %v130 = vsel %vm38, %v125, 0.0
  %v131 = vsel %vm39, %v124, 0.0
  %132 = vst [vmem:[#allocation2 + $0x60] sm:$0xff] %v128
  %133 = vst [vmem:[#allocation2 + $0x68] sm:$0xff] %v129
  %134 = vst [vmem:[#allocation2 + $0x70] sm:$0xff] %v130
  %135 = vst [vmem:[#allocation2 + $0x78] sm:$0xff] %v131
  %136 = vst [vmem:[#allocation2 + $0x80] sm:$0xff] %v11
  %137 = vst [vmem:[#allocation2 + $0x88] sm:$0xff] %v12
  %138 = vst [vmem:[#allocation2 + $0x90] sm:$0xff] %v13
  %139 = vst [vmem:[#allocation2 + $0x98] sm:$0xff] %v14
  %140 = vrot.lane.b32.xlu0 %v11, 127
  %v141 = vpop.permute.xlu0 %140
  %142 = vrot.lane.b32.xlu0 %v12, 127
  %v143 = vpop.permute.xlu0 %142
  %144 = vrot.lane.b32.xlu0 %v13, 127
  %v145 = vpop.permute.xlu0 %144
  %146 = vrot.lane.b32.xlu0 %v14, 127
  %v147 = vpop.permute.xlu0 %146
  %vm148 = vcmp.lt.s32.totalorder %v16, 127
  %v149 = vsel %vm148, %v145, %v147
  %v150 = vsel %vm148, %v143, %v145
  %v151 = vsel %vm148, %v141, %v143
  %v152 = vsel %vm148, %v147, %v141
  %v153 = vsel %vm40, %v151, 0.0
  %v154 = vsel %vm41, %v150, 0.0
  %v155 = vsel %vm42, %v149, 0.0
  %v156 = vsel %vm43, %v152, 0.0
  %157 = vst [vmem:[#allocation2 + $0xa0] sm:$0xff] %v153
  %158 = vst [vmem:[#allocation2 + $0xa8] sm:$0xff] %v154
  %159 = vst [vmem:[#allocation2 + $0xb0] sm:$0xff] %v155
  %160 = vst [vmem:[#allocation2 + $0xb8] sm:$0xff] %v156
  %161 = vrot.lane.b32.xlu0 %v11, 113
  %v162 = vpop.permute.xlu0 %161
  %163 = vrot.lane.b32.xlu0 %v12, 113
  %v164 = vpop.permute.xlu0 %163
  %165 = vrot.lane.b32.xlu0 %v13, 113
  %v166 = vpop.permute.xlu0 %165
  %167 = vrot.lane.b32.xlu0 %v14, 113
  %v168 = vpop.permute.xlu0 %167
  %vm169 = vcmp.lt.s32.totalorder %v16, 113
  %v170 = vsel %vm169, %v166, %v168
  %v171 = vsel %vm169, %v164, %v166
  %v172 = vsel %vm169, %v162, %v164
  %v173 = vsel %vm169, %v168, %v162
  %vm174 = vmand %vm32, %vm36
  %vm175 = vmand %vm33, %vm37
  %vm176 = vmand %vm34, %vm38
  %vm177 = vmand %vm35, %vm39
  %v178 = vsel %vm174, %v172, 0.0
  %v179 = vsel %vm175, %v171, 0.0
  %v180 = vsel %vm176, %v170, 0.0
  %v181 = vsel %vm177, %v173, 0.0
  %182 = vst [vmem:[#allocation2 + $0xc0] sm:$0xff] %v178
  %183 = vst [vmem:[#allocation2 + $0xc8] sm:$0xff] %v179
  %184 = vst [vmem:[#allocation2 + $0xd0] sm:$0xff] %v180
  %185 = vst [vmem:[#allocation2 + $0xd8] sm:$0xff] %v181
  %186 = vrot.lane.b32.xlu0 %v11, 112
  %v187 = vpop.permute.xlu0 %186
  %188 = vrot.lane.b32.xlu0 %v12, 112
  %v189 = vpop.permute.xlu0 %188
  %190 = vrot.lane.b32.xlu0 %v13, 112
  %v191 = vpop.permute.xlu0 %190
  %192 = vrot.lane.b32.xlu0 %v14, 112
  %v193 = vpop.permute.xlu0 %192
  %vm194 = vcmp.lt.s32.totalorder %v16, 112
  %v195 = vsel %vm194, %v191, %v193
  %v196 = vsel %vm194, %v189, %v191
  %v197 = vsel %vm194, %v187, %v189
  %v198 = vsel %vm194, %v193, %v187
  %v199 = vsel %vm32, %v197, 0.0
  %v200 = vsel %vm33, %v196, 0.0
  %v201 = vsel %vm34, %v195, 0.0
  %v202 = vsel %vm35, %v198, 0.0
  %203 = vst [vmem:[#allocation2 + $0xe0] sm:$0xff] %v199
  %204 = vst [vmem:[#allocation2 + $0xe8] sm:$0xff] %v200
  %205 = vst [vmem:[#allocation2 + $0xf0] sm:$0xff] %v201
  %206 = vst [vmem:[#allocation2 + $0xf8] sm:$0xff] %v202
  %207 = vrot.lane.b32.xlu0 %v11, 111
  %v208 = vpop.permute.xlu0 %207
  %209 = vrot.lane.b32.xlu0 %v12, 111
  %v210 = vpop.permute.xlu0 %209
  %211 = vrot.lane.b32.xlu0 %v13, 111
  %v212 = vpop.permute.xlu0 %211
  %213 = vrot.lane.b32.xlu0 %v14, 111
  %v214 = vpop.permute.xlu0 %213
  %vm215 = vcmp.lt.s32.totalorder %v16, 111
  %v216 = vsel %vm215, %v212, %v214
  %v217 = vsel %vm215, %v210, %v212
  %v218 = vsel %vm215, %v208, %v210
  %v219 = vsel %vm215, %v214, %v208
  %vm220 = vmand %vm32, %vm40
  %vm221 = vmand %vm33, %vm41
  %vm222 = vmand %vm34, %vm42
  %vm223 = vmand %vm35, %vm43
  %v224 = vsel %vm220, %v218, 0.0
  %v225 = vsel %vm221, %v217, 0.0
  %v226 = vsel %vm222, %v216, 0.0
  %v227 = vsel %vm223, %v219, 0.0
  %228 = vst [vmem:[#allocation2 + $0x100] sm:$0xff] %v224
  %229 = vst [vmem:[#allocation2 + $0x108] sm:$0xff] %v225
  %230 = vst [vmem:[#allocation2 + $0x110] sm:$0xff] %v226
  %231 = vst [vmem:[#allocation2 + $0x118] sm:$0xff] %v227
  %v232 = vld [vmem:[%s1] sm:$0xff]
  %v233 = vld [vmem:[#allocation2] sm:$0xff]
  %v234 = vld [vmem:[#allocation2 + $0x8] sm:$0xff]
  %v235 = vld [vmem:[#allocation2 + $0x10] sm:$0xff]
  %v236 = vld [vmem:[#allocation2 + $0x18] sm:$0xff]
  %v237 = vld [vmem:[#allocation2 + $0x20] sm:$0xff]
  %v238 = vld [vmem:[#allocation2 + $0x28] sm:$0xff]
  %v239 = vld [vmem:[#allocation2 + $0x30] sm:$0xff]
  %v240 = vld [vmem:[#allocation2 + $0x38] sm:$0xff]
  %v241 = vld [vmem:[#allocation2 + $0x40] sm:$0xff]
  %v242 = vld [vmem:[#allocation2 + $0x48] sm:$0xff]
  %v243 = vld [vmem:[#allocation2 + $0x50] sm:$0xff]
  %v244 = vld [vmem:[#allocation2 + $0x58] sm:$0xff]
  %v245 = vld [vmem:[#allocation2 + $0x60] sm:$0xff]
  %v246 = vld [vmem:[#allocation2 + $0x68] sm:$0xff]
  %v247 = vld [vmem:[#allocation2 + $0x70] sm:$0xff]
  %v248 = vld [vmem:[#allocation2 + $0x78] sm:$0xff]
  %v249 = vld [vmem:[#allocation2 + $0x80] sm:$0xff]
  %v250 = vld [vmem:[#allocation2 + $0x88] sm:$0xff]
  %v251 = vld [vmem:[#allocation2 + $0x90] sm:$0xff]
  %v252 = vld [vmem:[#allocation2 + $0x98] sm:$0xff]
  %v253 = vld [vmem:[#allocation2 + $0xa0] sm:$0xff]
  %v254 = vld [vmem:[#allocation2 + $0xa8] sm:$0xff]
  %v255 = vld [vmem:[#allocation2 + $0xb0] sm:$0xff]
  %v256 = vld [vmem:[#allocation2 + $0xb8] sm:$0xff]
  %v257 = vld [vmem:[#allocation2 + $0xc0] sm:$0xff]
  %v258 = vld [vmem:[#allocation2 + $0xc8] sm:$0xff]
  %v259 = vld [vmem:[#allocation2 + $0xd0] sm:$0xff]
  %v260 = vld [vmem:[#allocation2 + $0xd8] sm:$0xff]
  %v261 = vld [vmem:[#allocation2 + $0xe0] sm:$0xff]
  %v262 = vld [vmem:[#allocation2 + $0xe8] sm:$0xff]
  %v263 = vld [vmem:[#allocation2 + $0xf0] sm:$0xff]
  %v264 = vld [vmem:[#allocation2 + $0xf8] sm:$0xff]
  %v265 = vld [vmem:[#allocation2 + $0x100] sm:$0xff]
  %v266 = vld [vmem:[#allocation2 + $0x108] sm:$0xff]
  %v267 = vld [vmem:[#allocation2 + $0x110] sm:$0xff]
  %v268 = vld [vmem:[#allocation2 + $0x118] sm:$0xff]
  %vm269 = vcmask 588800
  %v271 = vsel %vm269, %v232, 0
  %273 = vmatprep.subr.mxu0 %v234
  %274 = vmatpush1.msra.mxu0 %v233
  %275 = vmatprep.subr.mxu0 %v238
  %276 = vmatpush1.msra.mxu0 %v237
  %277 = vmatprep.subr.mxu0 %v242
  %278 = vmatpush1.msra.mxu0 %v241
  %279 = vmatprep.subr.mxu0 %v246
  %280 = vmatpush1.msra.mxu0 %v245
  %281 = vmatprep.subr.mxu0 %v250
  %282 = vmatpush1.msra.mxu0 %v249
  %283 = vmatprep.subr.mxu0 %v254
  %284 = vmatpush1.msra.mxu0 %v253
  %285 = vmatprep.subr.mxu0 %v258
  %286 = vmatpush1.msra.mxu0 %v257
  %287 = vmatprep.subr.mxu0 %v262
  %288 = vmatpush1.msra.mxu0 %v261
  %289 = vmatprep.subr.mxu0 %v266
  %290 = vmatpush1.msra.mxu0 %v265
  %291 = vmatprep.subr.mxu0 0.0
  %292 = vmatpush1.msra.mxu0 0.0
  %293 = vmatprep.subr.mxu0 0.0
  %294 = vmatpush1.msra.mxu0 0.0
  %295 = vmatprep.subr.mxu0 0.0
  %296 = vmatpush1.msra.mxu0 0.0
  %297 = vmatprep.subr.mxu0 0.0
  %298 = vmatpush1.msra.mxu0 0.0
  %299 = vmatprep.subr.mxu0 0.0
  %300 = vmatpush1.msra.mxu0 0.0
  %301 = vmatprep.subr.mxu0 0.0
  %302 = vmatpush1.msra.mxu0 0.0
  %303 = vmatprep.subr.mxu0 0.0
  %304 = vmatpush1.msra.mxu0 0.0
  %305 = vmatprep.subr.mxu0 0.0
  %306 = vmatpush1.msra.mxu0 0.0
  %307 = vmatprep.subr.mxu0 0.0
  %308 = vmatpush1.msra.mxu0 0.0
  %309 = vmatprep.subr.mxu0 0.0
  %310 = vmatpush1.msra.mxu0 0.0
  %311 = vmatprep.subr.mxu0 0.0
  %312 = vmatpush1.msra.mxu0 0.0
  %313 = vmatprep.subr.mxu0 0.0
  %314 = vmatpush1.msra.mxu0 0.0
  %315 = vmatprep.subr.mxu0 0.0
  %316 = vmatpush1.msra.mxu0 0.0
  %317 = vmatprep.subr.mxu0 0.0
  %318 = vmatpush1.msra.mxu0 0.0
  %319 = vmatprep.subr.mxu0 0.0
  %320 = vmatpush1.msra.mxu0 0.0
  %321 = vmatprep.subr.mxu0 0.0
  %322 = vmatpush1.msra.mxu0 0.0
  %323 = vmatprep.subr.mxu0 0.0
  %324 = vmatpush1.msra.mxu0 0.0
  %325 = vmatprep.subr.mxu0 0.0
  %326 = vmatpush1.msra.mxu0 0.0
  %327 = vmatprep.subr.mxu0 0.0
  %328 = vmatpush1.msra.mxu0 0.0
  %329 = vmatprep.subr.mxu0 0.0
  %330 = vmatpush1.msra.mxu0 0.0
  %331 = vmatprep.subr.mxu0 0.0
  %332 = vmatpush1.msra.mxu0 0.0
  %333 = vmatprep.subr.mxu0 0.0
  %334 = vmatpush1.msra.mxu0 0.0
  %335 = vmatprep.subr.mxu0 0.0
  %336 = vmatpush1.msra.mxu0 0.0
  %337 = vmatprep.mubr.f32.mxu0 0.0
  %338 = vmatmul.mubr.f32.gmra.mrb[0].mxu0 %v271
  %v339 = vpop.f32.mrb[0].mxu0
  %v340 = vadd.f32 0.0, %v339
  %v341 = vpop.f32.mrb[0].mxu0
  %v342 = vadd.f32 0.0, %v341
  %343 = vdwg.mxu0
  %344 = vmatprep.subr.mxu0 %v236
  %345 = vmatpush1.msra.mxu0 %v235
  %346 = vmatprep.subr.mxu0 %v240
  %347 = vmatpush1.msra.mxu0 %v239
  %348 = vmatprep.subr.mxu0 %v244
  %349 = vmatpush1.msra.mxu0 %v243
  %350 = vmatprep.subr.mxu0 %v248
  %351 = vmatpush1.msra.mxu0 %v247
  %352 = vmatprep.subr.mxu0 %v252
  %353 = vmatpush1.msra.mxu0 %v251
  %354 = vmatprep.subr.mxu0 %v256
  %355 = vmatpush1.msra.mxu0 %v255
  %356 = vmatprep.subr.mxu0 %v260
  %357 = vmatpush1.msra.mxu0 %v259
  %358 = vmatprep.subr.mxu0 %v264
  %359 = vmatpush1.msra.mxu0 %v263
  %360 = vmatprep.subr.mxu0 %v268
  %361 = vmatpush1.msra.mxu0 %v267
  %362 = vmatprep.subr.mxu0 0.0
  %363 = vmatpush1.msra.mxu0 0.0
  %364 = vmatprep.subr.mxu0 0.0
  %365 = vmatpush1.msra.mxu0 0.0
  %366 = vmatprep.subr.mxu0 0.0
  %367 = vmatpush1.msra.mxu0 0.0
  %368 = vmatprep.subr.mxu0 0.0
  %369 = vmatpush1.msra.mxu0 0.0
  %370 = vmatprep.subr.mxu0 0.0
  %371 = vmatpush1.msra.mxu0 0.0
  %372 = vmatprep.subr.mxu0 0.0
  %373 = vmatpush1.msra.mxu0 0.0
  %374 = vmatprep.subr.mxu0 0.0
  %375 = vmatpush1.msra.mxu0 0.0
  %376 = vmatprep.subr.mxu0 0.0
  %377 = vmatpush1.msra.mxu0 0.0
  %378 = vmatprep.subr.mxu0 0.0
  %379 = vmatpush1.msra.mxu0 0.0
  %380 = vmatprep.subr.mxu0 0.0
  %381 = vmatpush1.msra.mxu0 0.0
  %382 = vmatprep.subr.mxu0 0.0
  %383 = vmatpush1.msra.mxu0 0.0
  %384 = vmatprep.subr.mxu0 0.0
  %385 = vmatpush1.msra.mxu0 0.0
  %386 = vmatprep.subr.mxu0 0.0
  %387 = vmatpush1.msra.mxu0 0.0
  %388 = vmatprep.subr.mxu0 0.0
  %389 = vmatpush1.msra.mxu0 0.0
  %390 = vmatprep.subr.mxu0 0.0
  %391 = vmatpush1.msra.mxu0 0.0
  %392 = vmatprep.subr.mxu0 0.0
  %393 = vmatpush1.msra.mxu0 0.0
  %394 = vmatprep.subr.mxu0 0.0
  %395 = vmatpush1.msra.mxu0 0.0
  %396 = vmatprep.subr.mxu0 0.0
  %397 = vmatpush1.msra.mxu0 0.0
  %398 = vmatprep.subr.mxu0 0.0
  %399 = vmatpush1.msra.mxu0 0.0
  %400 = vmatprep.subr.mxu0 0.0
  %401 = vmatpush1.msra.mxu0 0.0
  %402 = vmatprep.subr.mxu0 0.0
  %403 = vmatpush1.msra.mxu0 0.0
  %404 = vmatprep.subr.mxu0 0.0
  %405 = vmatpush1.msra.mxu0 0.0
  %406 = vmatprep.subr.mxu0 0.0
  %407 = vmatpush1.msra.mxu0 0.0
  %408 = vmatprep.mubr.f32.mxu0 0.0
  %409 = vmatmul.mubr.f32.gmra.mrb[0].mxu0 %v271
  %v410 = vpop.f32.mrb[0].mxu0
  %v411 = vadd.f32 0.0, %v410
  %v412 = vpop.f32.mrb[0].mxu0
  %v413 = vadd.f32 0.0, %v412
  %414 = vdwg.mxu0
  %415 = vst [vmem:[%s2] sm:$0xff] %v340
  %416 = vst [vmem:[%s2 + $0x8] sm:$0xff] %v342
  %s417 = scalar_lea.vmem %s2, 16
  %418 = vst [vmem:[%s417] sm:$0xff] %v411
  %419 = vst [vmem:[%s417 + $0x8] sm:$0xff] %v413
  // Predicated region
  $region10: #{conv2d_3x3.1} parent=0 // pred_check
    _
  $region11: #{conv2d_3x3.1} parent=0 // pred_check_branch
    %421 = sbr.rel (0) target = $region13
  $region12: #{conv2d_3x3.1} parent=0 // pred_region
    _
  $region13: #{conv2d_3x3.1} parent=0 // pred_fallthru
    _
  // Predicated region
  $region14: #{conv2d_3x3.1} parent=0 // pred_check
    _
  $region15: #{conv2d_3x3.1} parent=0 // pred_check_branch
    %423 = sbr.rel (0) target = $region17
  $region16: #{conv2d_3x3.1} parent=0 // pred_region
    _
  $region17: #{conv2d_3x3.1} parent=0 // pred_fallthru
    _

</llo_original>
